<compile_context>
chip_gen: v5e
topology: v5e:2x2
jax: 0.10.0
libtpu: 0.0.40
codegen_flags: <defaults>
</compile_context>

<pallas_src>
import functools

import numpy as np
import jax
import jax.numpy as jnp
from jax.experimental import pallas as pl
from jax.experimental.pallas import tpu as pltpu


def policy_net_kernel(x_ref, w1_ref, b1_ref, w2_ref, b2_ref, w3_ref, o_ref,
                      *, act_dtype):
    # x streamed as f32; cast to the MXU dtype on the VPU (free vs extra HBM pass).
    x = x_ref[...].astype(w1_ref.dtype)

    # Layer 1: Linear (f32 accumulate) + Tanh (act_dtype: bf16 on v6e/v7x, f32 on v5e).
    z1 = jnp.dot(x, w1_ref[...], preferred_element_type=jnp.float32) + b1_ref[...]
    h1 = jnp.tanh(z1.astype(act_dtype))

    # Layer 2: Linear + Tanh.
    z2 = jnp.dot(h1.astype(w2_ref.dtype), w2_ref[...],
                 preferred_element_type=jnp.float32) + b2_ref[...]
    h2 = jnp.tanh(z2.astype(act_dtype))

    # Layer 3: Linear (no bias).
    logits = jnp.dot(h2.astype(w3_ref.dtype), w3_ref[...],
                     preferred_element_type=jnp.float32)

    # Numerically stable softmax along the last dim (f32 math).
    m = jnp.max(logits, axis=-1, keepdims=True)
    e = jnp.exp(logits - m)
    s = jnp.sum(e, axis=-1, keepdims=True)
    inv = pl.reciprocal(s, approx=True)      # EUP slot (essentially free)
    inv = inv * (2.0 - s * inv)              # one Newton step -> ~f32 accuracy
    o_ref[...] = (e * inv).astype(o_ref.dtype)


def _round_up(a, m):
    return (a + m - 1) // m * m


def _default_act_dtype():
    # bf16 VPU/EUP exists on v6e/v7x; keep f32 activation math on v5e and older.
    try:
        kind = jax.devices()[0].device_kind.lower()
    except Exception:
        return jnp.float32
    if "v6" in kind or "v7" in kind:
        return jnp.bfloat16
    return jnp.float32


def init_params(key, state_dim, action_dim, hidden=64):
    # Orthogonal init with gain sqrt(2) (matches nn.init.orthogonal_), zero biases,
    # final layer has no bias. Weights stored as [in, out] so the kernel does x @ W.
    gain = float(np.sqrt(2.0))
    ortho = jax.nn.initializers.orthogonal(scale=gain)
    k1, k2, k3 = jax.random.split(key, 3)
    w1 = ortho(k1, (state_dim, hidden), jnp.float32)
    b1 = jnp.zeros((1, hidden), jnp.float32)
    w2 = ortho(k2, (hidden, hidden), jnp.float32)
    b2 = jnp.zeros((1, hidden), jnp.float32)
    w3 = ortho(k3, (hidden, action_dim), jnp.float32)
    return (w1, b1, w2, b2, w3)


def prepare_params(params, compute_dtype=jnp.bfloat16):
    """Cast weights to the MXU streaming dtype ONCE (hoisted out of the forward)."""
    w1, b1, w2, b2, w3 = params
    return (w1.astype(compute_dtype), b1.astype(jnp.float32),
            w2.astype(compute_dtype), b2.astype(jnp.float32),
            w3.astype(compute_dtype))


def policy_net_forward(x, prepared_params, *, tile_b=4096, act_dtype=None):
    """x: [B, state_dim] f32; prepared_params from prepare_params (W stored [in, out])."""
    w1, b1, w2, b2, w3 = prepared_params
    B, S = x.shape
    H = w1.shape[1]
    A = w3.shape[1]

    if act_dtype is None:
        act_dtype = _default_act_dtype()

    # Batch tile: multiple of 8 (sublane), clamped so small batches use one step.
    # No full-tile padding: the grid uses cdiv and the final block is partial.
    tile = max(8, min(_round_up(tile_b, 8), _round_up(B, 8)))
    grid = (pl.cdiv(B, tile),)

    kernel = functools.partial(policy_net_kernel, act_dtype=act_dtype)

    out = pl.pallas_call(
        kernel,
        out_shape=jax.ShapeDtypeStruct((B, A), jnp.float32),
        grid=grid,
        in_specs=[
            pl.BlockSpec((tile, S), lambda i: (i, 0)),   # x: streamed (f32) over batch
            pl.BlockSpec((S, H), lambda i: (0, 0)),      # w1: VMEM-resident
            pl.BlockSpec((1, H), lambda i: (0, 0)),      # b1
            pl.BlockSpec((H, H), lambda i: (0, 0)),      # w2
            pl.BlockSpec((1, H), lambda i: (0, 0)),      # b2
            pl.BlockSpec((H, A), lambda i: (0, 0)),      # w3
        ],
        out_specs=pl.BlockSpec((tile, A), lambda i: (i, 0)),
        compiler_params=pltpu.CompilerParams(
            dimension_semantics=("parallel",),           # 2-TC split on v7x
        ),
    )(x, w1, b1, w2, b2, w3)

    return out


def reference_forward(x, prepared_params, act_dtype=None):
    # Same numeric path as the kernel (bf16 matmul streams, f32 accumulate,
    # act_dtype tanh), in plain JAX.
    if act_dtype is None:
        act_dtype = _default_act_dtype()
    w1, b1, w2, b2, w3 = prepared_params
    xc = x.astype(w1.dtype)
    h1 = jnp.tanh((jnp.dot(xc, w1, preferred_element_type=jnp.float32)
                   + b1).astype(act_dtype))
    h2 = jnp.tanh((jnp.dot(h1.astype(w2.dtype), w2,
                           preferred_element_type=jnp.float32)
                   + b2).astype(act_dtype))
    logits = jnp.dot(h2.astype(w3.dtype), w3, preferred_element_type=jnp.float32)
    return jax.nn.softmax(logits, axis=-1)


if __name__ == "__main__":
    key = jax.random.PRNGKey(0)
    state_dim, action_dim = 16, 4

    k_params, k_x1, k_x2 = jax.random.split(key, 3)
    params = prepare_params(init_params(k_params, state_dim, action_dim))

    # Case 1: small single-tile batch.
    x1 = jax.random.normal(k_x1, (8, state_dim), dtype=jnp.float32)
    out1 = jax.block_until_ready(policy_net_forward(x1, params))
    ref1 = reference_forward(x1, params)
    np.testing.assert_allclose(np.asarray(out1), np.asarray(ref1),
                               rtol=1e-3, atol=1e-3)
    np.testing.assert_allclose(np.asarray(out1).sum(axis=-1), np.ones(8),
                               rtol=1e-5, atol=1e-5)

    # Case 2: multi-step grid with a partial (non-divisible) final block.
    x2 = jax.random.normal(k_x2, (35, state_dim), dtype=jnp.float32)
    out2 = jax.block_until_ready(policy_net_forward(x2, params, tile_b=16))
    ref2 = reference_forward(x2, params)
    np.testing.assert_allclose(np.asarray(out2), np.asarray(ref2),
                               rtol=1e-3, atol=1e-3)
    np.testing.assert_allclose(np.asarray(out2).sum(axis=-1), np.ones(35),
                               rtol=1e-5, atol=1e-5)

    print("KERNEL_OK")
</pallas_src>

<mosaic_0001>
module attributes {stable_mosaic.version = 11 : i64} {
  func.func @policy_net_kernel(%arg0: i32, %arg1: memref<8x16xf32, #tpu.memory_space<vmem>>, %arg2: memref<16x64xbf16, #tpu.memory_space<vmem>>, %arg3: memref<1x64xf32, #tpu.memory_space<vmem>>, %arg4: memref<64x64xbf16, #tpu.memory_space<vmem>>, %arg5: memref<1x64xf32, #tpu.memory_space<vmem>>, %arg6: memref<64x4xbf16, #tpu.memory_space<vmem>>, %arg7: memref<8x4xf32, #tpu.memory_space<vmem>>) attributes {dimension_semantics = [#tpu.dimension_semantics<parallel>], iteration_bounds = array<i64: 1>, scalar_prefetch = 0 : i64, scratch_operands = 0 : i64, tpu.core_type = #tpu.core_type<tc>, window_params = [{transform_indices = @transform_0, window_bounds = array<i64: 8, 16>}, {pipeline_mode = #tpu.pipeline_mode<synchronous>, transform_indices = @transform_1, window_bounds = array<i64: 16, 64>}, {pipeline_mode = #tpu.pipeline_mode<synchronous>, transform_indices = @transform_2, window_bounds = array<i64: 1, 64>}, {pipeline_mode = #tpu.pipeline_mode<synchronous>, transform_indices = @transform_3, window_bounds = array<i64: 64, 64>}, {pipeline_mode = #tpu.pipeline_mode<synchronous>, transform_indices = @transform_4, window_bounds = array<i64: 1, 64>}, {pipeline_mode = #tpu.pipeline_mode<synchronous>, transform_indices = @transform_5, window_bounds = array<i64: 64, 4>}, {transform_indices = @transform_6, window_bounds = array<i64: 8, 4>}]} {
    %c0 = arith.constant 0 : index
    %c0_0 = arith.constant 0 : index
    %0 = vector.load %arg1[%c0, %c0_0] : memref<8x16xf32, #tpu.memory_space<vmem>>, vector<8x16xf32>
    %1 = arith.truncf %0 : vector<8x16xf32> to vector<8x16xbf16>
    %c0_1 = arith.constant 0 : index
    %c0_2 = arith.constant 0 : index
    %2 = vector.load %arg2[%c0_1, %c0_2] : memref<16x64xbf16, #tpu.memory_space<vmem>>, vector<16x64xbf16>
    %cst = arith.constant dense<0.000000e+00> : vector<8x64xf32>
    %3 = tpu.matmul %1, %2, %cst {dimension_numbers = #tpu.dot_dimension_numbers<[1], [0], [0], [1], [0, 0, 1, 1], [], []>} : vector<8x16xbf16>, vector<16x64xbf16>, vector<8x64xf32> -> vector<8x64xf32>
    %c0_3 = arith.constant 0 : index
    %c0_4 = arith.constant 0 : index
    %4 = vector.load %arg3[%c0_3, %c0_4] : memref<1x64xf32, #tpu.memory_space<vmem>>, vector<1x64xf32>
    %5 = vector.broadcast %4 : vector<1x64xf32> to vector<8x64xf32>
    %6 = arith.addf %3, %5 : vector<8x64xf32>
    %7 = math.tanh %6 : vector<8x64xf32>
    %8 = arith.truncf %7 : vector<8x64xf32> to vector<8x64xbf16>
    %c0_5 = arith.constant 0 : index
    %c0_6 = arith.constant 0 : index
    %9 = vector.load %arg4[%c0_5, %c0_6] : memref<64x64xbf16, #tpu.memory_space<vmem>>, vector<64x64xbf16>
    %cst_7 = arith.constant dense<0.000000e+00> : vector<8x64xf32>
    %10 = tpu.matmul %8, %9, %cst_7 {dimension_numbers = #tpu.dot_dimension_numbers<[1], [0], [0], [1], [0, 0, 1, 1], [], []>} : vector<8x64xbf16>, vector<64x64xbf16>, vector<8x64xf32> -> vector<8x64xf32>
    %c0_8 = arith.constant 0 : index
    %c0_9 = arith.constant 0 : index
    %11 = vector.load %arg5[%c0_8, %c0_9] : memref<1x64xf32, #tpu.memory_space<vmem>>, vector<1x64xf32>
    %12 = vector.broadcast %11 : vector<1x64xf32> to vector<8x64xf32>
    %13 = arith.addf %10, %12 : vector<8x64xf32>
    %14 = math.tanh %13 : vector<8x64xf32>
    %15 = arith.truncf %14 : vector<8x64xf32> to vector<8x64xbf16>
    %c0_10 = arith.constant 0 : index
    %c0_11 = arith.constant 0 : index
    %16 = vector.load %arg6[%c0_10, %c0_11] : memref<64x4xbf16, #tpu.memory_space<vmem>>, vector<64x4xbf16>
    %cst_12 = arith.constant dense<0.000000e+00> : vector<8x4xf32>
    %17 = tpu.matmul %15, %16, %cst_12 {dimension_numbers = #tpu.dot_dimension_numbers<[1], [0], [0], [1], [0, 0, 1, 1], [], []>} : vector<8x64xbf16>, vector<64x4xbf16>, vector<8x4xf32> -> vector<8x4xf32>
    %cst_13 = arith.constant dense<0xFF800000> : vector<8xf32>
    %18 = vector.multi_reduction <maximumf>, %17, %cst_13 [1] : vector<8x4xf32> to vector<8xf32>
    %19 = vector.shape_cast %18 : vector<8xf32> to vector<8x1xf32>
    %20 = vector.broadcast %19 : vector<8x1xf32> to vector<8x4xf32>
    %21 = arith.subf %17, %20 : vector<8x4xf32>
    %22 = math.exp %21 : vector<8x4xf32>
    %cst_14 = arith.constant dense<0.000000e+00> : vector<8xf32>
    %23 = vector.multi_reduction <add>, %22, %cst_14 [1] : vector<8x4xf32> to vector<8xf32>
    %24 = vector.shape_cast %23 : vector<8xf32> to vector<8x1xf32>
    %25 = tpu.reciprocal %24 {approx = true} : vector<8x1xf32> -> vector<8x1xf32>
    %26 = arith.mulf %24, %25 : vector<8x1xf32>
    %cst_15 = arith.constant 2.000000e+00 : f32
    %27 = vector.broadcast %cst_15 : f32 to vector<8x1xf32>
    %28 = arith.subf %27, %26 : vector<8x1xf32>
    %29 = arith.mulf %25, %28 : vector<8x1xf32>
    %30 = vector.broadcast %29 : vector<8x1xf32> to vector<8x4xf32>
    %31 = arith.mulf %22, %30 : vector<8x4xf32>
    %c0_16 = arith.constant 0 : index
    %c0_17 = arith.constant 0 : index
    %32 = vector.load %arg7[%c0_16, %c0_17] : memref<8x4xf32, #tpu.memory_space<vmem>>, vector<8x4xf32>
    tpu.vector_store %arg7[%c0_16, %c0_17], %31 {strides = array<i32>} : memref<8x4xf32, #tpu.memory_space<vmem>>, vector<8x4xf32>,
    return
  }
  func.func @transform_0(%arg0: i32) -> (i32, i32) {
    %c0_i32 = arith.constant 0 : i32
    %c0_i32_0 = arith.constant 0 : i32
    return %arg0, %c0_i32 : i32, i32
  }
  func.func @transform_1(%arg0: i32) -> (i32, i32) {
    %c0_i32 = arith.constant 0 : i32
    %c0_i32_0 = arith.constant 0 : i32
    %c0_i32_1 = arith.constant 0 : i32
    return %c0_i32, %c0_i32_0 : i32, i32
  }
  func.func @transform_2(%arg0: i32) -> (i32, i32) {
    %c0_i32 = arith.constant 0 : i32
    %c0_i32_0 = arith.constant 0 : i32
    %c0_i32_1 = arith.constant 0 : i32
    return %c0_i32, %c0_i32_0 : i32, i32
  }
  func.func @transform_3(%arg0: i32) -> (i32, i32) {
    %c0_i32 = arith.constant 0 : i32
    %c0_i32_0 = arith.constant 0 : i32
    %c0_i32_1 = arith.constant 0 : i32
    return %c0_i32, %c0_i32_0 : i32, i32
  }
  func.func @transform_4(%arg0: i32) -> (i32, i32) {
    %c0_i32 = arith.constant 0 : i32
    %c0_i32_0 = arith.constant 0 : i32
    %c0_i32_1 = arith.constant 0 : i32
    return %c0_i32, %c0_i32_0 : i32, i32
  }
  func.func @transform_5(%arg0: i32) -> (i32, i32) {
    %c0_i32 = arith.constant 0 : i32
    %c0_i32_0 = arith.constant 0 : i32
    %c0_i32_1 = arith.constant 0 : i32
    return %c0_i32, %c0_i32_0 : i32, i32
  }
  func.func @transform_6(%arg0: i32) -> (i32, i32) {
    %c0_i32 = arith.constant 0 : i32
    %c0_i32_0 = arith.constant 0 : i32
    return %arg0, %c0_i32 : i32, i32
  }
}

</mosaic_0001>

<llo_original>
// kernel: tpu_custom_call.1
$region0: #{tpu_custom_call.1}
  #allocation0 [shape = 'u32[]', space=smem, size = 0x4, offset = 0x4, fixed_abs, tag = 'smem constant byte address 0x4 - core index']
  #allocation1 [shape = 'u32[72,128]{1,0:T(1,128)}', space=vmem, size = 0x9000, scoped, tag = 'internal scratch']
  %s0 = inlined_call_operand.hbm [shape: f32[8,16], index: 0, kind: input, shape index: {}]
  %s1 = inlined_call_operand.hbm [shape: bf16[16,64], index: 1, kind: input, shape index: {}]
  %s2 = inlined_call_operand.vmem [shape: f32[1,64], index: 2, kind: input, shape index: {}]
  %s3 = inlined_call_operand.vmem [shape: bf16[64,64], index: 3, kind: input, shape index: {}]
  %s4 = inlined_call_operand.vmem [shape: f32[1,64], index: 4, kind: input, shape index: {}]
  %s5 = inlined_call_operand.vmem [shape: bf16[64,4], index: 5, kind: input, shape index: {}]
  %s6 = inlined_call_operand.vmem [shape: f32[8,4], index: 6, kind: output, shape index: {}]
  %s7 = sld [smem:[#allocation0]]
  $region42: #{tpu_custom_call.1} parent=0
    _
  %s9 = ssub.s32 1, %s7
  %s10 = scalar_select 0, %s9, %s7
  $region1: #{tpu_custom_call.1} parent=0
    #allocation2 [shape = 'u8[4096]{0}', space=vmem, size = 0x1000, scoped, tag = 'input window, operand 0, single buffered']
    #allocation3 [shape = 's32[1]{0}', space=sflag, size = 0x4, scoped, tag = 'scoped memory for tpu_custom_call.1']
    #allocation4 [shape = 'u8[4096]{0}', space=vmem, size = 0x1000, scoped, tag = 'input window, operand 1, single buffered']
    #allocation5 [shape = 's32[1]{0}', space=sflag, size = 0x4, scoped, tag = 'scoped memory for tpu_custom_call.1']
    %11 = vsyncpa [#allocation3], 0
    %12 = vsyncpa [#allocation5], 0
    // Predicated region
    $region2: #{tpu_custom_call.1} parent=1 // pred_check
      _
    $region3: #{tpu_custom_call.1} parent=1 // pred_check_branch
      %14 = sbr.rel (0) target = $region5
    $region4: #{tpu_custom_call.1} parent=1 // pred_region
      %16 = vsyncadd [#allocation3], 0
      %s18 = sshll.u32 %s0, 4
      %s19 = int_to_ptr.hbm [resolvable:$true] %s18
      %s20 = sshll.u32 [#allocation2], 4
      %s21 = int_to_ptr.vmem [resolvable:$true] %s20
      %23 = dma.hbm_to_vmem [thread:$0]  %s19, 128, %s21, [#allocation3]
    $region5: #{tpu_custom_call.1} parent=1 // pred_fallthru
      _
    // Predicated region
    $region6: #{tpu_custom_call.1} parent=1 // pred_check
      _
    $region7: #{tpu_custom_call.1} parent=1 // pred_check_branch
      %25 = sbr.rel (0) target = $region9
    $region8: #{tpu_custom_call.1} parent=1 // pred_region
      %27 = vsyncadd [#allocation5], 0
      %s28 = sshll.u32 %s1, 4
      %s29 = int_to_ptr.hbm [resolvable:$true] %s28
      %s30 = sshll.u32 [#allocation4], 4
      %s31 = int_to_ptr.vmem [resolvable:$true] %s30
      %36 = dma.hbm_to_vmem [thread:$0]  %s29, 128, %s31, [#allocation5], 64, 64, 4
    $region9: #{tpu_custom_call.1} parent=1 // pred_fallthru
      _
    // Predicated region
    $region10: #{tpu_custom_call.1} parent=1 // pred_check
      _
    $region11: #{tpu_custom_call.1} parent=1 // pred_check_branch
      %38 = sbr.rel (0) target = $region13
    $region12: #{tpu_custom_call.1} parent=1 // pred_region
      _
    $region13: #{tpu_custom_call.1} parent=1 // pred_fallthru
      _
    // Predicated region
    $region14: #{tpu_custom_call.1} parent=1 // pred_check
      _
    $region15: #{tpu_custom_call.1} parent=1 // pred_check_branch
      %40 = sbr.rel (0) target = $region17
    $region16: #{tpu_custom_call.1} parent=1 // pred_region
      _
    $region17: #{tpu_custom_call.1} parent=1 // pred_fallthru
      _
    // Predicated region
    $region18: #{tpu_custom_call.1} parent=1 // pred_check
      _
    $region19: #{tpu_custom_call.1} parent=1 // pred_check_branch
      %42 = sbr.rel (0) target = $region21
    $region20: #{tpu_custom_call.1} parent=1 // pred_region
      _
    $region21: #{tpu_custom_call.1} parent=1 // pred_fallthru
      _
    // Predicated region
    $region22: #{tpu_custom_call.1} parent=1 // pred_check
      _
    $region23: #{tpu_custom_call.1} parent=1 // pred_check_branch
      %44 = sbr.rel (0) target = $region25
    $region24: #{tpu_custom_call.1} parent=1 // pred_region
      _
    $region25: #{tpu_custom_call.1} parent=1 // pred_fallthru
      _
    // Predicated region
    $region26: #{tpu_custom_call.1} parent=1 // pred_check
      _
    $region27: #{tpu_custom_call.1} parent=1 // pred_check_branch
      %46 = sbr.rel (0) target = $region29
    $region28: #{tpu_custom_call.1} parent=1 // pred_region
      %48 = dma.done [#allocation3], 128
    $region29: #{tpu_custom_call.1} parent=1 // pred_fallthru
      _
    // Predicated region
    $region30: #{tpu_custom_call.1} parent=1 // pred_check
      _
    $region31: #{tpu_custom_call.1} parent=1 // pred_check_branch
      %50 = sbr.rel (0) target = $region33
    $region32: #{tpu_custom_call.1} parent=1 // pred_region
      %52 = dma.done [#allocation5], 128
    $region33: #{tpu_custom_call.1} parent=1 // pred_fallthru
      _
    %v54 = vld [vmem:[#allocation2] sm:$0xff]
    %v55 = vpack.c.bf16 %v54, %v54
    %v56 = vld [vmem:[#allocation4] sm:$0xf]
    %v57 = vld [vmem:[#allocation4 + $0x4] sm:$0xf]
    %v58 = vld [vmem:[%s2] sm:$0x1]
    %v60 = vperm.slane %v58, 0
    %v64 = vunpack.c.l.b16 %v56
    %v65 = vunpack.c.l.b16 %v57
    %v66 = vpack.c.b16 %v65, %v64
    %vm68 = vcmask 130048
    %v70 = vsel %vm68, %v55, 0
    %72 = vmatpush.bf16.msra.mxu0 0
    %73 = vmatpush.bf16.msra.mxu0 0
    %74 = vmatpush.bf16.msra.mxu0 0
    %75 = vmatpush.bf16.msra.mxu0 0
    %76 = vmatpush.bf16.msra.mxu0 0
    %77 = vmatpush.bf16.msra.mxu0 0
    %78 = vmatpush.bf16.msra.mxu0 0
    %79 = vmatpush.bf16.msra.mxu0 %v66
    %80 = vmatmul.bf16.gmra.mxu0 %v70
    %v81 = vpop.f32.mrf.mxu0
    %v82 = vadd.f32 %v60, %v81
    %v83 = vpop.f32.mrf.mxu0
    %84 = vdwg.mxu0
    %v85 = vtanh.pop %v82
    %v86 = vpack.c.bf16 %v85, %v85
    %v87 = vld [vmem:[%s3] sm:$0xf]
    %v88 = vld [vmem:[%s3 + $0x4] sm:$0xf]
    %v89 = vld [vmem:[%s3 + $0x8] sm:$0xf]
    %v90 = vld [vmem:[%s3 + $0xc] sm:$0xf]
    %v91 = vld [vmem:[%s3 + $0x10] sm:$0xf]
    %v92 = vld [vmem:[%s3 + $0x14] sm:$0xf]
    %v93 = vld [vmem:[%s3 + $0x18] sm:$0xf]
    %v94 = vld [vmem:[%s3 + $0x1c] sm:$0xf]
    %v95 = vld [vmem:[%s4] sm:$0x1]
    %v97 = vperm.slane %v95, 0
    %v107 = vunpack.c.l.b16 %v87
    %v108 = vunpack.c.l.b16 %v88
    %v109 = vunpack.c.l.b16 %v89
    %v110 = vunpack.c.l.b16 %v90
    %v111 = vunpack.c.l.b16 %v91
    %v112 = vunpack.c.l.b16 %v92
    %v113 = vunpack.c.l.b16 %v93
    %v114 = vunpack.c.l.b16 %v94
    %v115 = vpack.c.b16 %v108, %v107
    %v116 = vpack.c.b16 %v110, %v109
    %v117 = vpack.c.b16 %v112, %v111
    %v118 = vpack.c.b16 %v114, %v113
    %vm123 = vcmask 523264
    %v125 = vsel %vm123, %v86, 0
    %127 = vmatpush.bf16.msra.mxu0 0
    %128 = vmatpush.bf16.msra.mxu0 0
    %129 = vmatpush.bf16.msra.mxu0 0
    %130 = vmatpush.bf16.msra.mxu0 0
    %131 = vmatpush.bf16.msra.mxu0 %v118
    %132 = vmatpush.bf16.msra.mxu0 %v117
    %133 = vmatpush.bf16.msra.mxu0 %v116
    %134 = vmatpush.bf16.msra.mxu0 %v115
    %135 = vmatmul.bf16.gmra.mxu0 %v125
    %v136 = vpop.f32.mrf.mxu0
    %v137 = vadd.f32 %v97, %v136
    %v138 = vpop.f32.mrf.mxu0
    %139 = vdwg.mxu0
    %v140 = vtanh.pop %v137
    %v141 = vpack.c.bf16 %v140, %v140
    %v142 = vld [vmem:[%s5] sm:$0xf]
    %v143 = vld [vmem:[%s5 + $0x4] sm:$0xf]
    %v144 = vld [vmem:[%s5 + $0x8] sm:$0xf]
    %v145 = vld [vmem:[%s5 + $0xc] sm:$0xf]
    %v146 = vld [vmem:[%s5 + $0x10] sm:$0xf]
    %v147 = vld [vmem:[%s5 + $0x14] sm:$0xf]
    %v148 = vld [vmem:[%s5 + $0x18] sm:$0xf]
    %v149 = vld [vmem:[%s5 + $0x1c] sm:$0xf]
    %v158 = vunpack.c.l.b16 %v142
    %v159 = vunpack.c.l.b16 %v143
    %v160 = vunpack.c.l.b16 %v144
    %v161 = vunpack.c.l.b16 %v145
    %v162 = vunpack.c.l.b16 %v146
    %v163 = vunpack.c.l.b16 %v147
    %v164 = vunpack.c.l.b16 %v148
    %v165 = vunpack.c.l.b16 %v149
    %v166 = vpack.c.b16 %v159, %v158
    %v167 = vpack.c.b16 %v161, %v160
    %v168 = vpack.c.b16 %v163, %v162
    %v169 = vpack.c.b16 %v165, %v164
    %v175 = vsel %vm123, %v141, 0
    %177 = vmatpush.bf16.msra.mxu0 0
    %178 = vmatpush.bf16.msra.mxu0 0
    %179 = vmatpush.bf16.msra.mxu0 0
    %180 = vmatpush.bf16.msra.mxu0 0
    %181 = vmatpush.bf16.msra.mxu0 %v169
    %182 = vmatpush.bf16.msra.mxu0 %v168
    %183 = vmatpush.bf16.msra.mxu0 %v167
    %184 = vmatpush.bf16.msra.mxu0 %v166
    %185 = vmatmul.bf16.gmra.mxu0 %v175
    %v186 = vpop.f32.mrf.mxu0
    %v187 = vadd.f32 0.0, %v186
    %v188 = vpop.f32.mrf.mxu0
    %189 = vdwg.mxu0
    %vm190 = vcmask 31744
    %v191 = vsel %vm190, %v187, -inf
    %192 = vmax.xlane.f32.xlu0 %v191
    %v193 = vpop.xlane.xlu0 %192
    %v194 = vsub.f32 %v187, %v193
    %v195 = vmul.f32 %v194, 1.442695
    %v196 = vpow.pop %v195
    %v197 = vsel %vm190, %v196, 0.0
    %198 = vadd.xlane.f32.xlu0 %v197
    %v199 = vpop.xlane.xlu0 %198
    %v200 = vrcp.pop %v199
    %v201 = vmul.f32 %v199, %v200
    %v202 = vsub.f32 2.0, %v201
    %v203 = vmul.f32 %v200, %v202
    %v204 = vmul.f32 %v196, %v203
    %205 = vst.msk [vmem:[%s6] sm:$0xff] %vm190, %v204
    // Predicated region
    $region34: #{tpu_custom_call.1} parent=1 // pred_check
      _
    $region35: #{tpu_custom_call.1} parent=1 // pred_check_branch
      %207 = sbr.rel (0) target = $region37
    $region36: #{tpu_custom_call.1} parent=1 // pred_region
      _
    $region37: #{tpu_custom_call.1} parent=1 // pred_fallthru
      _
    // Predicated region
    $region38: #{tpu_custom_call.1} parent=1 // pred_check
      _
    $region39: #{tpu_custom_call.1} parent=1 // pred_check_branch
      %209 = sbr.rel (0) target = $region41
    $region40: #{tpu_custom_call.1} parent=1 // pred_region
      _
    $region41: #{tpu_custom_call.1} parent=1 // pred_fallthru
      _
    %210 = vsyncpa [#allocation3], 1
    %211 = vsyncpa [#allocation5], 1

</llo_original>
